<compile_context>
chip_gen: v6e
topology: v6e:2x2x1
jax: 0.10.0
libtpu: 0.0.40
codegen_flags: <defaults>
</compile_context>

<pallas_src>
import functools

import jax
import jax.numpy as jnp
from jax.experimental import pallas as pl
from jax.experimental.pallas import tpu as pltpu

_LANES = 128
_FOLD = 64  # rows of the per-block partial-sum tile -> 8 independent f32 acc vregs


def _mse_partial_kernel(f_ref, w_ref, out_ref, *, rows, block_rows):
    """Partial sum of squared differences for one (block_rows, 128) block.

    Writes a (64, 128) lane-dense partial-sum tile. The (possibly partial)
    last grid block is masked against the true full-row count `rows`.
    """
    i = pl.program_id(0)

    def reduce_block(mask_tail):
        f = f_ref[...].astype(jnp.float32)
        w = w_ref[...].astype(jnp.float32)
        d = f - w
        sq = d * d
        if mask_tail:
            # Rows at/after `rows` (only reachable in the last grid block) are
            # out-of-bounds garbage from the partial DMA -> select 0 for them.
            valid = rows - i * block_rows  # dynamic scalar, = block_rows for full blocks
            row_id = jax.lax.broadcasted_iota(jnp.int32, sq.shape, 0)
            sq = jnp.where(row_id < valid, sq, 0.0)
        # (block_rows, 128) -> (block_rows//64, 64, 128); leading-axis sum is
        # pure VPU elementwise adds into 8 independent accumulator vregs.
        return jnp.sum(sq.reshape(block_rows // _FOLD, _FOLD, _LANES), axis=0)

    @pl.when(i < pl.num_programs(0) - 1)
    def _():
        out_ref[...] = reduce_block(False)

    @pl.when(i == pl.num_programs(0) - 1)
    def _():
        out_ref[...] = reduce_block(True)


def _target_block_rows():
    """Per-generation default block size (rows of 128 lanes)."""
    try:
        kind = jax.devices()[0].device_kind.lower()
    except Exception:  # pragma: no cover - defensive
        kind = ""
    if "v7" in kind:
        return 16384  # 8 MiB/input block (f32); ~32 MiB double-buffered
    return 8192       # 4 MiB/input block (f32); fits comfortably everywhere


def mse_custom(features, weights, *, target_block_rows=None):
    """Pallas equivalent of MSECustom.forward = F.mse_loss(features, weights)."""
    assert features.shape == weights.shape, "mse_loss requires matching shapes"
    total = int(features.size)
    if total == 0:
        return jnp.asarray(jnp.nan, jnp.float32)  # torch: mean of empty -> nan

    f_flat = features.reshape(-1)  # free (bitcast) reshape for default layouts
    w_flat = weights.reshape(-1)

    rows = total // _LANES          # number of full 128-lane rows
    rem = total - rows * _LANES     # ragged lane tail (< 128 elements)

    # Tiny inputs: a kernel launch is not worth it (and avoids sub-tile blocks).
    if rows < _FOLD:
        d = f_flat.astype(jnp.float32) - w_flat.astype(jnp.float32)
        return jnp.sum(d * d) / total

    if target_block_rows is None:
        target_block_rows = _target_block_rows()

    # block_rows: a multiple of _FOLD, large enough to amortize the ~0.35us
    # per-grid-step overhead, but capped so the grid has >= 2 steps whenever
    # possible (v7x megacore sharding of the "parallel" axis).
    block_rows = min(target_block_rows, max(_FOLD, (rows // 2) // _FOLD * _FOLD))
    num_blocks = pl.cdiv(rows, block_rows)

    # Lane-dense main slab. When rem == 0 this is a free reshape (no copy);
    # otherwise one prefix slice per input (the <128-element tail is reduced
    # with plain jnp below).
    f2 = (f_flat if rem == 0 else f_flat[: rows * _LANES]).reshape(rows, _LANES)
    w2 = (w_flat if rem == 0 else w_flat[: rows * _LANES]).reshape(rows, _LANES)

    # Scoped-VMEM budget: 2 inputs x 2 pipeline buffers x block + headroom.
    in_block_bytes = block_rows * _LANES * (f2.dtype.itemsize + w2.dtype.itemsize)
    vmem_limit = int(min(max(2 * in_block_bytes + (8 << 20), 32 << 20), 48 << 20))

    kernel = functools.partial(_mse_partial_kernel, rows=rows, block_rows=block_rows)

    partials = pl.pallas_call(
        kernel,
        out_shape=jax.ShapeDtypeStruct((num_blocks * _FOLD, _LANES), jnp.float32),
        grid=(num_blocks,),
        in_specs=[
            pl.BlockSpec((block_rows, _LANES), lambda i: (i, 0)),
            pl.BlockSpec((block_rows, _LANES), lambda i: (i, 0)),
        ],
        out_specs=pl.BlockSpec((_FOLD, _LANES), lambda i: (i, 0)),
        compiler_params=pltpu.CompilerParams(
            dimension_semantics=("parallel",),
            vmem_limit_bytes=vmem_limit,
        ),
    )(f2, w2)

    sq_sum = jnp.sum(partials)

    if rem:
        # Ragged lane tail (< 128 elements) — negligible, done in plain jnp.
        tf = f_flat[rows * _LANES:].astype(jnp.float32)
        tw = w_flat[rows * _LANES:].astype(jnp.float32)
        td = tf - tw
        sq_sum = sq_sum + jnp.sum(td * td)

    # Mean over the TRUE element count.
    return sq_sum / total


if __name__ == "__main__":
    key = jax.random.PRNGKey(0)
    k1, k2, k3, k4, k5, k6 = jax.random.split(key, 6)

    # Case 1: f32, multi-block grid with a partially-valid last block
    # (2*4*33*32 = 8448 elements = 66 lane-rows -> 2 blocks of 64 rows,
    #  last block has only 2 valid rows -> exercises the in-kernel mask).
    shape1 = (2, 4, 33, 32)
    f1 = jax.random.normal(k1, shape1, dtype=jnp.float32)
    w1 = jax.random.normal(k2, shape1, dtype=jnp.float32)
    out1 = jax.block_until_ready(mse_custom(f1, w1))
    ref1 = jnp.mean((f1 - w1) ** 2)
    assert jnp.allclose(out1, ref1, rtol=1e-5, atol=1e-6), (out1, ref1)

    # Case 2: bf16 inputs (native-dtype streaming, in-kernel f32 cast) with a
    # ragged lane tail: 2*5*25*34 = 8500 elements = 66 rows + 52 tail elems.
    shape2 = (2, 5, 25, 34)
    f2_ = jax.random.normal(k3, shape2, dtype=jnp.bfloat16)
    w2_ = jax.random.normal(k4, shape2, dtype=jnp.bfloat16)
    out2 = jax.block_until_ready(mse_custom(f2_, w2_))
    ref2 = jnp.mean((f2_.astype(jnp.float32) - w2_.astype(jnp.float32)) ** 2)
    assert jnp.allclose(out2, ref2, rtol=2e-5, atol=1e-6), (out2, ref2)

    # Case 3: the spec's small example shape (2048 elements -> tiny-input path).
    shape3 = (2, 4, 16, 16)
    f3 = jax.random.normal(k5, shape3, dtype=jnp.float32)
    w3 = jax.random.normal(k6, shape3, dtype=jnp.float32)
    out3 = jax.block_until_ready(mse_custom(f3, w3))
    ref3 = jnp.mean((f3 - w3) ** 2)
    assert jnp.allclose(out3, ref3, rtol=1e-5, atol=1e-6), (out3, ref3)

    print("KERNEL_OK")
</pallas_src>

<mosaic_0001>
module attributes {stable_mosaic.version = 11 : i64} {
  func.func @_mse_partial_kernel(%arg0: i32, %arg1: memref<64x128xf32, #tpu.memory_space<vmem>>, %arg2: memref<64x128xf32, #tpu.memory_space<vmem>>, %arg3: memref<64x128xf32, #tpu.memory_space<vmem>>) attributes {dimension_semantics = [#tpu.dimension_semantics<parallel>], iteration_bounds = array<i64: 2>, scalar_prefetch = 0 : i64, scratch_operands = 0 : i64, tpu.core_type = #tpu.core_type<tc>, window_params = [{transform_indices = @transform_0, window_bounds = array<i64: 64, 128>}, {transform_indices = @transform_1, window_bounds = array<i64: 64, 128>}, {transform_indices = @transform_2, window_bounds = array<i64: 64, 128>}]} {
    %c1_i32 = arith.constant 1 : i32
    %0 = arith.cmpi slt, %arg0, %c1_i32 : i32
    %1 = arith.extui %0 : i1 to i32
    %c0_i32 = arith.constant 0 : i32
    %2 = arith.cmpi ne, %1, %c0_i32 : i32
    scf.if %2 {
      %c0 = arith.constant 0 : index
      %c0_2 = arith.constant 0 : index
      %6 = vector.load %arg1[%c0, %c0_2] : memref<64x128xf32, #tpu.memory_space<vmem>>, vector<64x128xf32>
      %c0_3 = arith.constant 0 : index
      %c0_4 = arith.constant 0 : index
      %7 = vector.load %arg2[%c0_3, %c0_4] : memref<64x128xf32, #tpu.memory_space<vmem>>, vector<64x128xf32>
      %8 = arith.subf %6, %7 : vector<64x128xf32>
      %9 = arith.mulf %8, %8 : vector<64x128xf32>
      %10 = vector.shape_cast %9 : vector<64x128xf32> to vector<1x64x128xf32>
      %cst = arith.constant dense<0.000000e+00> : vector<64x128xf32>
      %11 = vector.multi_reduction <add>, %10, %cst [0] : vector<1x64x128xf32> to vector<64x128xf32>
      %c0_5 = arith.constant 0 : index
      %c0_6 = arith.constant 0 : index
      %12 = vector.load %arg3[%c0_5, %c0_6] : memref<64x128xf32, #tpu.memory_space<vmem>>, vector<64x128xf32>
      tpu.vector_store %arg3[%c0_5, %c0_6], %11 {strides = array<i32>} : memref<64x128xf32, #tpu.memory_space<vmem>>, vector<64x128xf32>,
    } else {
    }
    %c1_i32_0 = arith.constant 1 : i32
    %3 = arith.cmpi eq, %arg0, %c1_i32_0 : i32
    %4 = arith.extui %3 : i1 to i32
    %c0_i32_1 = arith.constant 0 : i32
    %5 = arith.cmpi ne, %4, %c0_i32_1 : i32
    scf.if %5 {
      %c0 = arith.constant 0 : index
      %c0_2 = arith.constant 0 : index
      %6 = vector.load %arg1[%c0, %c0_2] : memref<64x128xf32, #tpu.memory_space<vmem>>, vector<64x128xf32>
      %c0_3 = arith.constant 0 : index
      %c0_4 = arith.constant 0 : index
      %7 = vector.load %arg2[%c0_3, %c0_4] : memref<64x128xf32, #tpu.memory_space<vmem>>, vector<64x128xf32>
      %8 = arith.subf %6, %7 : vector<64x128xf32>
      %9 = arith.mulf %8, %8 : vector<64x128xf32>
      %c64_i32 = arith.constant 64 : i32
      %10 = arith.muli %arg0, %c64_i32 : i32
      %c66_i32 = arith.constant 66 : i32
      %11 = arith.subi %c66_i32, %10 : i32
      %12 = tpu.iota {dimensions = array<i32: 0>} : vector<64x128xi32>
      %13 = vector.broadcast %11 : i32 to vector<64x128xi32>
      %14 = arith.cmpi slt, %12, %13 : vector<64x128xi32>
      %cst = arith.constant 0.000000e+00 : f32
      %15 = vector.broadcast %cst : f32 to vector<64x128xf32>
      %16 = arith.select %14, %9, %15 : vector<64x128xi1>, vector<64x128xf32>
      %17 = vector.shape_cast %16 : vector<64x128xf32> to vector<1x64x128xf32>
      %cst_5 = arith.constant dense<0.000000e+00> : vector<64x128xf32>
      %18 = vector.multi_reduction <add>, %17, %cst_5 [0] : vector<1x64x128xf32> to vector<64x128xf32>
      %c0_6 = arith.constant 0 : index
      %c0_7 = arith.constant 0 : index
      %19 = vector.load %arg3[%c0_6, %c0_7] : memref<64x128xf32, #tpu.memory_space<vmem>>, vector<64x128xf32>
      tpu.vector_store %arg3[%c0_6, %c0_7], %18 {strides = array<i32>} : memref<64x128xf32, #tpu.memory_space<vmem>>, vector<64x128xf32>,
    } else {
    }
    return
  }
  func.func @transform_0(%arg0: i32) -> (i32, i32) {
    %c0_i32 = arith.constant 0 : i32
    %c0_i32_0 = arith.constant 0 : i32
    return %arg0, %c0_i32 : i32, i32
  }
  func.func @transform_1(%arg0: i32) -> (i32, i32) {
    %c0_i32 = arith.constant 0 : i32
    %c0_i32_0 = arith.constant 0 : i32
    return %arg0, %c0_i32 : i32, i32
  }
  func.func @transform_2(%arg0: i32) -> (i32, i32) {
    %c0_i32 = arith.constant 0 : i32
    %c0_i32_0 = arith.constant 0 : i32
    return %arg0, %c0_i32 : i32, i32
  }
}

</mosaic_0001>

<llo_original>
// kernel: tpu_custom_call.1
$region0: #{tpu_custom_call.1}
  #allocation0 [shape = 'u32[]', space=smem, size = 0x4, offset = 0x4, fixed_abs, tag = 'smem constant byte address 0x4 - core index']
  #allocation1 [shape = 'u32[144,128]{1,0:T(1,128)}', space=vmem, size = 0x12000, scoped, tag = 'internal scratch']
  %s0 = inlined_call_operand.hbm [shape: f32[66,128], index: 0, kind: input, shape index: {}]
  %s1 = inlined_call_operand.hbm [shape: f32[66,128], index: 1, kind: input, shape index: {}]
  %s2 = inlined_call_operand.hbm [shape: f32[128,128], index: 2, kind: output, shape index: {}]
  %s3 = sld [smem:[#allocation0]]
  $region57: #{tpu_custom_call.1} parent=0
    _
  %s5 = ssub.s32 1, %s3
  %s6 = scalar_select 0, %s5, %s3
  $region1: #{tpu_custom_call.1} parent=0
    #allocation2 [shape = 'u8[65536]{0}', space=vmem, size = 0x10000, scoped, tag = 'input window, operand 0']
    #allocation3 [shape = 's32[2]{0}', space=sflag, size = 0x8, scoped, tag = 'scoped memory for tpu_custom_call.1']
    #allocation4 [shape = 's32[2]{0}', space=sflag, size = 0x8, scoped, tag = 'scoped memory for tpu_custom_call.1']
    #allocation5 [shape = 'u8[65536]{0}', space=vmem, size = 0x10000, scoped, tag = 'input window, operand 1']
    #allocation6 [shape = 's32[2]{0}', space=sflag, size = 0x8, scoped, tag = 'scoped memory for tpu_custom_call.1']
    #allocation7 [shape = 'u8[65536]{0}', space=vmem, size = 0x10000, scoped, tag = 'output window, operand 0']
    %7 = vsyncpa [#allocation3], 0
    %s8 = scalar_lea.sflag [#allocation3], 1
    %9 = vsyncpa %s8, 0
    %10 = vsyncpa [#allocation6], 0
    %s11 = scalar_lea.sflag [#allocation6], 1
    %12 = vsyncpa %s11, 0
    %13 = vsyncpa [#allocation4], 0
    %s14 = scalar_lea.sflag [#allocation4], 1
    %15 = vsyncpa %s14, 0
    loop: start=0, step=1, limit=4
    $region2: #{tpu_custom_call.1} parent=1 // loop_pre_header
      _
    $region3: #{tpu_custom_call.1} parent=1 // loop_header
      %s17 = sphi 0, %s21
      %p18 = scmp.ge.s32.totalorder %s17, 4
      %s27 = sphi 0, %s29
      %s30 = sphi 0, %s27
      %s31 = sphi 0, %s30
      %s47 = sphi 0, %s31
      %s53 = sphi 0, %s55
      %s56 = sphi 0, %s53
      %s57 = sphi 0, %s56
      %s73 = sphi 0, %s57
      %s79 = sphi 0, %s81
      %s82 = sphi 0, %s79
      %s83 = sphi 0, %s82
      %s99 = sphi 0, %s83
    $region4: #{tpu_custom_call.1} parent=1 // loop_header_branch
      %20 = sbr.rel (%p18) target = $region8
    $region5: #{tpu_custom_call.1} parent=1 // loop_body
      %s22 = ssub.s32 %s17, 1
      %s23 = ssub.s32 %s17, 2
      %s24 = sadd.s32 %s17, 1
      %s25 = ssub.s32 %s17, %s24
      %p26 = scmp.eq.s32.totalorder %s25, 0
      %s28 = sadd.s32 %s27, 1
      %s29 = scalar_select %p26, %s27, %s28
      %p32 = pneg %p26
      %p33 = scmp.eq.s32.totalorder %s17, 1
      %p34 = por %p32, %p33
      %p35 = scmp.ne.s32.totalorder %s27, %s30
      %p36 = scmp.eq.s32.totalorder %s17, 0
      %p37 = por %p35, %p36
      %p38 = scmp.ne.s32.totalorder %s27, %s30
      %p39 = scmp.eq.s32.totalorder %s22, 1
      %p40 = por %p38, %p39
      %p41 = scmp.ne.s32.totalorder %s30, %s31
      %p42 = scmp.eq.s32.totalorder %s22, 0
      %p43 = por %p41, %p42
      %p44 = scmp.ne.s32.totalorder %s30, %s31
      %p45 = scmp.eq.s32.totalorder %s23, 1
      %p46 = por %p44, %p45
      %p48 = scmp.ne.s32.totalorder %s31, %s47
      %p49 = scmp.eq.s32.totalorder %s23, 0
      %p50 = por %p48, %p49
      %s51 = ssub.s32 %s17, %s24
      %p52 = scmp.eq.s32.totalorder %s51, 0
      %s54 = sadd.s32 %s53, 1
      %s55 = scalar_select %p52, %s53, %s54
      %p58 = pneg %p52
      %p59 = scmp.eq.s32.totalorder %s17, 1
      %p60 = por %p58, %p59
      %p61 = scmp.ne.s32.totalorder %s53, %s56
      %p62 = scmp.eq.s32.totalorder %s17, 0
      %p63 = por %p61, %p62
      %p64 = scmp.ne.s32.totalorder %s53, %s56
      %p65 = scmp.eq.s32.totalorder %s22, 1
      %p66 = por %p64, %p65
      %p67 = scmp.ne.s32.totalorder %s56, %s57
      %p68 = scmp.eq.s32.totalorder %s22, 0
      %p69 = por %p67, %p68
      %p70 = scmp.ne.s32.totalorder %s56, %s57
      %p71 = scmp.eq.s32.totalorder %s23, 1
      %p72 = por %p70, %p71
      %p74 = scmp.ne.s32.totalorder %s57, %s73
      %p75 = scmp.eq.s32.totalorder %s23, 0
      %p76 = por %p74, %p75
      %s77 = ssub.s32 %s17, %s24
      %p78 = scmp.eq.s32.totalorder %s77, 0
      %s80 = sadd.s32 %s79, 1
      %s81 = scalar_select %p78, %s79, %s80
      %p84 = pneg %p78
      %p85 = scmp.eq.s32.totalorder %s17, 1
      %p86 = por %p84, %p85
      %p87 = scmp.ne.s32.totalorder %s79, %s82
      %p88 = scmp.eq.s32.totalorder %s17, 0
      %p89 = por %p87, %p88
      %p90 = scmp.ne.s32.totalorder %s79, %s82
      %p91 = scmp.eq.s32.totalorder %s22, 1
      %p92 = por %p90, %p91
      %p93 = scmp.ne.s32.totalorder %s82, %s83
      %p94 = scmp.eq.s32.totalorder %s22, 0
      %p95 = por %p93, %p94
      %p96 = scmp.ne.s32.totalorder %s82, %s83
      %p97 = scmp.eq.s32.totalorder %s23, 1
      %p98 = por %p96, %p97
      %p100 = scmp.ne.s32.totalorder %s83, %s99
      %p101 = scmp.eq.s32.totalorder %s23, 0
      %p102 = por %p100, %p101
      %p103 = scmp.le.s32.totalorder 1, %s17
      %p104 = scmp.lt.s32.totalorder %s17, 3
      %p105 = pnand %p103, %p104
      %p106 = pneg %p105
      // Predicated region
      $region9: #{tpu_custom_call.1} parent=5 // pred_check
        _
      $region10: #{tpu_custom_call.1} parent=5 // pred_check_branch
        %108 = sbr.rel (%p105) target = $region12
      $region11: #{tpu_custom_call.1} parent=5 // pred_region
        %s109 = ssub.s32 %s17, 1
      $region12: #{tpu_custom_call.1} parent=5 // pred_fallthru
        _
      %p110 = scmp.lt.s32.totalorder %s17, 2
      // Predicated region
      $region13: #{tpu_custom_call.1} parent=5 // pred_check
        %p111 = pneg %p110
      $region14: #{tpu_custom_call.1} parent=5 // pred_check_branch
        %113 = sbr.rel (%p111) target = $region16
      $region15: #{tpu_custom_call.1} parent=5 // pred_region
        // Predicated region
        $region17: #{tpu_custom_call.1} parent=15 // pred_check
          %p114 = pneg %p37
        $region18: #{tpu_custom_call.1} parent=15 // pred_check_branch
          %116 = sbr.rel (%p114) target = $region20
        $region19: #{tpu_custom_call.1} parent=15 // pred_region
          %s117 = sand.u32 %s27, 1
          %s118 = scalar_lea.sflag [#allocation3], %s117
          %s119 = sand.u32 %s27, 1
          %s120 = smul.addr %s119, 64
          %s121 = scalar_lea.vmem [#allocation2], %s120
          %s122 = smul.u32 8, %s17
          %s123 = ssub.s32 9, %s122
          %p124 = scmp.lt.s32.totalorder %s123, 8
          %s125 = scalar_select %p124, %s123, 8
          %s126 = smul.u32 128, %s125
          %s128 = ssub.s32 1024, %s126
          %129 = vsyncadd %s118, %s128
          %p130 = scmp.ne.s32.totalorder 0, %s126
          %s131 = smul.addr %s122, 128
          %s132 = scalar_lea.hbm %s0, %s131
          %s133 = smul.u32 8, %s125
          %s134 = sshll.u32 %s121, 4
          %s135 = int_to_ptr.vmem [resolvable:$true] %s134
          %s136 = sshll.u32 %s133, 4
          %140 = dma.hbm_to_vmem [thread:$0]  (%p130), %s132, %s136, %s135, %s118, 128, 128, 8
        $region20: #{tpu_custom_call.1} parent=15 // pred_fallthru
          _
        // Predicated region
        $region21: #{tpu_custom_call.1} parent=15 // pred_check
          %p141 = pneg %p63
        $region22: #{tpu_custom_call.1} parent=15 // pred_check_branch
          %143 = sbr.rel (%p141) target = $region24
        $region23: #{tpu_custom_call.1} parent=15 // pred_region
          %s144 = sand.u32 %s53, 1
          %s145 = scalar_lea.sflag [#allocation6], %s144
          %s146 = sand.u32 %s53, 1
          %s147 = smul.addr %s146, 64
          %s148 = scalar_lea.vmem [#allocation5], %s147
          %s149 = smul.u32 8, %s17
          %s150 = ssub.s32 9, %s149
          %p151 = scmp.lt.s32.totalorder %s150, 8
          %s152 = scalar_select %p151, %s150, 8
          %s153 = smul.u32 128, %s152
          %s155 = ssub.s32 1024, %s153
          %156 = vsyncadd %s145, %s155
          %p157 = scmp.ne.s32.totalorder 0, %s153
          %s158 = smul.addr %s149, 128
          %s159 = scalar_lea.hbm %s1, %s158
          %s160 = smul.u32 8, %s152
          %s161 = sshll.u32 %s148, 4
          %s162 = int_to_ptr.vmem [resolvable:$true] %s161
          %s163 = sshll.u32 %s160, 4
          %167 = dma.hbm_to_vmem [thread:$0]  (%p157), %s159, %s163, %s162, %s145, 128, 128, 8
        $region24: #{tpu_custom_call.1} parent=15 // pred_fallthru
          _
      $region16: #{tpu_custom_call.1} parent=5 // pred_fallthru
        _
      %p168 = scmp.le.s32.totalorder 1, %s17
      %p169 = scmp.lt.s32.totalorder %s17, 3
      %p170 = pnand %p168, %p169
      %p171 = pneg %p170
      // Predicated region
      $region25: #{tpu_custom_call.1} parent=5 // pred_check
        _
      $region26: #{tpu_custom_call.1} parent=5 // pred_check_branch
        %173 = sbr.rel (%p170) target = $region28
      $region27: #{tpu_custom_call.1} parent=5 // pred_region
        %s174 = ssub.s32 %s17, 1
        %s175 = sand.u32 %s30, 1
        %s176 = scalar_lea.sflag [#allocation3], %s175
        %s177 = sand.u32 %s30, 1
        %s178 = smul.addr %s177, 64
        %s179 = scalar_lea.vmem [#allocation2], %s178
        // Predicated region
        $region29: #{tpu_custom_call.1} parent=27 // pred_check
          %p180 = pneg %p43
        $region30: #{tpu_custom_call.1} parent=27 // pred_check_branch
          %182 = sbr.rel (%p180) target = $region32
        $region31: #{tpu_custom_call.1} parent=27 // pred_region
          %183 = dma.done %s176, 1024
        $region32: #{tpu_custom_call.1} parent=27 // pred_fallthru
          _
        %s184 = sand.u32 %s56, 1
        %s185 = scalar_lea.sflag [#allocation6], %s184
        %s186 = sand.u32 %s56, 1
        %s187 = smul.addr %s186, 64
        %s188 = scalar_lea.vmem [#allocation5], %s187
        // Predicated region
        $region33: #{tpu_custom_call.1} parent=27 // pred_check
          %p189 = pneg %p69
        $region34: #{tpu_custom_call.1} parent=27 // pred_check_branch
          %191 = sbr.rel (%p189) target = $region36
        $region35: #{tpu_custom_call.1} parent=27 // pred_region
          %192 = dma.done %s185, 1024
        $region36: #{tpu_custom_call.1} parent=27 // pred_fallthru
          _
        %s193 = sand.u32 %s30, 1
        %s194 = scalar_lea.sflag [#allocation3], %s193
        %s195 = sand.u32 %s30, 1
        %s196 = smul.addr %s195, 64
        %s197 = scalar_lea.vmem [#allocation2], %s196
        %p198 = pneg %p43
        %p199 = pneg %p40
        %s200 = sand.u32 %s56, 1
        %s201 = scalar_lea.sflag [#allocation6], %s200
        %s202 = sand.u32 %s56, 1
        %s203 = smul.addr %s202, 64
        %s204 = scalar_lea.vmem [#allocation5], %s203
        %p205 = pneg %p69
        %p206 = pneg %p66
        %p207 = pneg %p95
        %p208 = pneg %p92
        %s209 = sand.u32 %s82, 1
        %s210 = scalar_lea.sflag [#allocation4], %s209
        %s211 = sand.u32 %s82, 1
        %s212 = smul.addr %s211, 64
        %s213 = scalar_lea.vmem [#allocation7], %s212
        %s214 = smul.u32 8, %s22
        %s215 = ssub.s32 9, %s214
        %p216 = scmp.lt.s32.totalorder %s215, 8
        %s217 = scalar_select %p216, %s215, 8
        %s218 = smul.u32 128, %s217
        %s219 = smul.u32 8, %s22
        %s220 = ssub.s32 9, %s219
        %p221 = scmp.lt.s32.totalorder %s220, 8
        %s222 = scalar_select %p221, %s220, 8
        %s223 = smul.u32 128, %s222
        %s224 = smul.u32 8, %s22
        %p225 = scmp.lt.s32.totalorder %s22, 1
        // Predicated region
        $region37: #{tpu_custom_call.1} parent=27 // pred_check
          %p226 = pneg %p225
        $region38: #{tpu_custom_call.1} parent=27 // pred_check_branch
          %228 = sbr.rel (%p226) target = $region40
        $region39: #{tpu_custom_call.1} parent=27 // pred_region
          %v229 = vld [vmem:[%s179] sm:$0xff]
          %v230 = vld [vmem:[%s179 + $0x8] sm:$0xff]
          %v231 = vld [vmem:[%s179 + $0x10] sm:$0xff]
          %v232 = vld [vmem:[%s179 + $0x18] sm:$0xff]
          %v233 = vld [vmem:[%s179 + $0x20] sm:$0xff]
          %v234 = vld [vmem:[%s179 + $0x28] sm:$0xff]
          %v235 = vld [vmem:[%s179 + $0x30] sm:$0xff]
          %v236 = vld [vmem:[%s179 + $0x38] sm:$0xff]
          %v237 = vld [vmem:[%s188] sm:$0xff]
          %v238 = vld [vmem:[%s188 + $0x8] sm:$0xff]
          %v239 = vld [vmem:[%s188 + $0x10] sm:$0xff]
          %v240 = vld [vmem:[%s188 + $0x18] sm:$0xff]
          %v241 = vld [vmem:[%s188 + $0x20] sm:$0xff]
          %v242 = vld [vmem:[%s188 + $0x28] sm:$0xff]
          %v243 = vld [vmem:[%s188 + $0x30] sm:$0xff]
          %v244 = vld [vmem:[%s188 + $0x38] sm:$0xff]
          %v245 = vsub.f32 %v229, %v237
          %v246 = vsub.f32 %v230, %v238
          %v247 = vsub.f32 %v231, %v239
          %v248 = vsub.f32 %v232, %v240
          %v249 = vsub.f32 %v233, %v241
          %v250 = vsub.f32 %v234, %v242
          %v251 = vsub.f32 %v235, %v243
          %v252 = vsub.f32 %v236, %v244
          %v253 = vmul.f32 %v245, %v245
          %v254 = vmul.f32 %v246, %v246
          %v255 = vmul.f32 %v247, %v247
          %v256 = vmul.f32 %v248, %v248
          %v257 = vmul.f32 %v249, %v249
          %v258 = vmul.f32 %v250, %v250
          %v259 = vmul.f32 %v251, %v251
          %v260 = vmul.f32 %v252, %v252
          %v261 = vadd.f32 %v253, 0.0
          %v262 = vadd.f32 %v254, 0.0
          %v263 = vadd.f32 %v255, 0.0
          %v264 = vadd.f32 %v256, 0.0
          %v265 = vadd.f32 %v257, 0.0
          %v266 = vadd.f32 %v258, 0.0
          %v267 = vadd.f32 %v259, 0.0
          %v268 = vadd.f32 %v260, 0.0
          %269 = vst [vmem:[%s213] sm:$0xff] %v261
          %270 = vst [vmem:[%s213 + $0x8] sm:$0xff] %v262
          %271 = vst [vmem:[%s213 + $0x10] sm:$0xff] %v263
          %272 = vst [vmem:[%s213 + $0x18] sm:$0xff] %v264
          %273 = vst [vmem:[%s213 + $0x20] sm:$0xff] %v265
          %274 = vst [vmem:[%s213 + $0x28] sm:$0xff] %v266
          %275 = vst [vmem:[%s213 + $0x30] sm:$0xff] %v267
          %276 = vst [vmem:[%s213 + $0x38] sm:$0xff] %v268
        $region40: #{tpu_custom_call.1} parent=27 // pred_fallthru
          _
        %p277 = scmp.eq.s32.totalorder %s22, 1
        // Predicated region
        $region41: #{tpu_custom_call.1} parent=27 // pred_check
          %p278 = pneg %p277
        $region42: #{tpu_custom_call.1} parent=27 // pred_check_branch
          %280 = sbr.rel (%p278) target = $region44
        $region43: #{tpu_custom_call.1} parent=27 // pred_region
          %v281 = vld [vmem:[%s179] sm:$0xff]
          %v282 = vld [vmem:[%s179 + $0x8] sm:$0xff]
          %v283 = vld [vmem:[%s179 + $0x10] sm:$0xff]
          %v284 = vld [vmem:[%s179 + $0x18] sm:$0xff]
          %v285 = vld [vmem:[%s179 + $0x20] sm:$0xff]
          %v286 = vld [vmem:[%s179 + $0x28] sm:$0xff]
          %v287 = vld [vmem:[%s179 + $0x30] sm:$0xff]
          %v288 = vld [vmem:[%s179 + $0x38] sm:$0xff]
          %v289 = vld [vmem:[%s188] sm:$0xff]
          %v290 = vld [vmem:[%s188 + $0x8] sm:$0xff]
          %v291 = vld [vmem:[%s188 + $0x10] sm:$0xff]
          %v292 = vld [vmem:[%s188 + $0x18] sm:$0xff]
          %v293 = vld [vmem:[%s188 + $0x20] sm:$0xff]
          %v294 = vld [vmem:[%s188 + $0x28] sm:$0xff]
          %v295 = vld [vmem:[%s188 + $0x30] sm:$0xff]
          %v296 = vld [vmem:[%s188 + $0x38] sm:$0xff]
          %v297 = vsub.f32 %v281, %v289
          %v298 = vsub.f32 %v282, %v290
          %v299 = vsub.f32 %v283, %v291
          %v300 = vsub.f32 %v284, %v292
          %v301 = vsub.f32 %v285, %v293
          %v302 = vsub.f32 %v286, %v294
          %v303 = vsub.f32 %v287, %v295
          %v304 = vsub.f32 %v288, %v296
          %v305 = vmul.f32 %v297, %v297
          %v306 = vmul.f32 %v298, %v298
          %v307 = vmul.f32 %v299, %v299
          %v308 = vmul.f32 %v300, %v300
          %v309 = vmul.f32 %v301, %v301
          %v310 = vmul.f32 %v302, %v302
          %v311 = vmul.f32 %v303, %v303
          %v312 = vmul.f32 %v304, %v304
          %s313 = smul.u32 %s22, 64
          %s314 = ssub.s32 66, %s313
          %v315 = vlaneseq
          %v316 = vshrl.u32 %v315, 7
          %v317 = vadd.s32 %v316, 8
          %v318 = vadd.s32 %v316, 16
          %v319 = vadd.s32 %v316, 24
          %v320 = vadd.s32 %v316, 32
          %v321 = vadd.s32 %v316, 40
          %v322 = vadd.s32 %v316, 48
          %v323 = vadd.s32 %v316, 56
          %v324 = vstv %s314
          %vm325 = vcmp.lt.s32.totalorder %v316, %v324
          %vm326 = vcmp.lt.s32.totalorder %v317, %v324
          %vm327 = vcmp.lt.s32.totalorder %v318, %v324
          %vm328 = vcmp.lt.s32.totalorder %v319, %v324
          %vm329 = vcmp.lt.s32.totalorder %v320, %v324
          %vm330 = vcmp.lt.s32.totalorder %v321, %v324
          %vm331 = vcmp.lt.s32.totalorder %v322, %v324
          %vm332 = vcmp.lt.s32.totalorder %v323, %v324
          %v333 = vsel %vm325, %v305, 0.0
          %v334 = vsel %vm326, %v306, 0.0
          %v335 = vsel %vm327, %v307, 0.0
          %v336 = vsel %vm328, %v308, 0.0
          %v337 = vsel %vm329, %v309, 0.0
          %v338 = vsel %vm330, %v310, 0.0
          %v339 = vsel %vm331, %v311, 0.0
          %v340 = vsel %vm332, %v312, 0.0
          %v341 = vadd.f32 %v333, 0.0
          %v342 = vadd.f32 %v334, 0.0
          %v343 = vadd.f32 %v335, 0.0
          %v344 = vadd.f32 %v336, 0.0
          %v345 = vadd.f32 %v337, 0.0
          %v346 = vadd.f32 %v338, 0.0
          %v347 = vadd.f32 %v339, 0.0
          %v348 = vadd.f32 %v340, 0.0
          %349 = vst [vmem:[%s213] sm:$0xff] %v341
          %350 = vst [vmem:[%s213 + $0x8] sm:$0xff] %v342
          %351 = vst [vmem:[%s213 + $0x10] sm:$0xff] %v343
          %352 = vst [vmem:[%s213 + $0x18] sm:$0xff] %v344
          %353 = vst [vmem:[%s213 + $0x20] sm:$0xff] %v345
          %354 = vst [vmem:[%s213 + $0x28] sm:$0xff] %v346
          %355 = vst [vmem:[%s213 + $0x30] sm:$0xff] %v347
          %356 = vst [vmem:[%s213 + $0x38] sm:$0xff] %v348
        $region44: #{tpu_custom_call.1} parent=27 // pred_fallthru
          _
        %s357 = sand.u32 %s82, 1
        %s358 = scalar_lea.sflag [#allocation4], %s357
        %s359 = sand.u32 %s82, 1
        %s360 = smul.addr %s359, 64
        %s361 = scalar_lea.vmem [#allocation7], %s360
        // Predicated region
        $region45: #{tpu_custom_call.1} parent=27 // pred_check
          %p362 = pneg %p92
        $region46: #{tpu_custom_call.1} parent=27 // pred_check_branch
          %364 = sbr.rel (%p362) target = $region48
        $region47: #{tpu_custom_call.1} parent=27 // pred_region
          %s365 = smul.u32 8, %s22
          %s367 = ssub.s32 1024, 1024
          %368 = vsyncadd %s358, %s367
          %s369 = smul.addr %s365, 128
          %s370 = scalar_lea.hbm %s2, %s369
          %s371 = sshll.u32 %s361, 4
          %s372 = int_to_ptr.vmem [resolvable:$true] %s371
          %377 = dma.vmem_to_hbm [thread:$0]  %s372, 1024, %s370, %s358, 128, 128, 8
        $region48: #{tpu_custom_call.1} parent=27 // pred_fallthru
          _
      $region28: #{tpu_custom_call.1} parent=5 // pred_fallthru
        _
      %p378 = scmp.le.s32.totalorder 2, %s17
      // Predicated region
      $region49: #{tpu_custom_call.1} parent=5 // pred_check
        %p379 = pneg %p378
      $region50: #{tpu_custom_call.1} parent=5 // pred_check_branch
        %381 = sbr.rel (%p379) target = $region52
      $region51: #{tpu_custom_call.1} parent=5 // pred_region
        %s382 = ssub.s32 %s17, 2
        // Predicated region
        $region53: #{tpu_custom_call.1} parent=51 // pred_check
          %p383 = pneg %p98
        $region54: #{tpu_custom_call.1} parent=51 // pred_check_branch
          %385 = sbr.rel (%p383) target = $region56
        $region55: #{tpu_custom_call.1} parent=51 // pred_region
          %s386 = sand.u32 %s83, 1
          %s387 = scalar_lea.sflag [#allocation4], %s386
          %s388 = sand.u32 %s83, 1
          %s389 = smul.addr %s388, 64
          %s390 = scalar_lea.vmem [#allocation7], %s389
          %391 = dma.done %s387, 1024
        $region56: #{tpu_custom_call.1} parent=51 // pred_fallthru
          _
      $region52: #{tpu_custom_call.1} parent=5 // pred_fallthru
        _
    $region6: #{tpu_custom_call.1} parent=1 // loop_footer
      %s21 = sadd.s32 1, %s17
    $region7: #{tpu_custom_call.1} parent=1 // loop_footer_branch
      %16 = sbr.rel target = $region3
    $region8: #{tpu_custom_call.1} parent=1 // loop_exit
      _
    %392 = vsyncpa [#allocation3], 1
    %s393 = scalar_lea.sflag [#allocation3], 1
    %394 = vsyncpa %s393, 1
    %395 = vsyncpa [#allocation6], 1
    %s396 = scalar_lea.sflag [#allocation6], 1
    %397 = vsyncpa %s396, 1
    %398 = vsyncpa [#allocation4], 1
    %s399 = scalar_lea.sflag [#allocation4], 1
    %400 = vsyncpa %s399, 1

</llo_original>
